<compile_context>
chip_gen: v7x
topology: tpu7x:2x2x1
jax: 0.10.0
libtpu: 0.0.40
codegen_flags: <defaults>
</compile_context>

<pallas_src>
import jax
import jax.numpy as jnp
from jax.experimental import pallas as pl
from jax.experimental.pallas import tpu as pltpu


def _round_up(n: int, m: int) -> int:
    return ((n + m - 1) // m) * m


def _make_stft_loss_kernel(k_pad: int, eps: float):
    """Kernel closure with static padded-bin count and clamp eps."""

    def kernel(xf_ref, yf_ref, basis_ref,
               sqdiff_ref, sqy_ref, abslog_ref,
               acc_d, acc_y, acc_l):
        k = pl.program_id(1)          # reduction step within this parallel slice

        # Zero the lane-shaped VMEM accumulators at the start of each slice.
        @pl.when(k == 0)
        def _init():
            acc_d[...] = jnp.zeros_like(acc_d)
            acc_y[...] = jnp.zeros_like(acc_y)
            acc_l[...] = jnp.zeros_like(acc_l)

        basis = basis_ref[...]        # (n_fft, 2*k_pad) bf16, window folded in

        # Windowed real DFT: 2 wide bf16 MXU matmuls with f32 accumulation.
        xs = jnp.dot(xf_ref[...], basis, preferred_element_type=jnp.float32)
        ys = jnp.dot(yf_ref[...], basis, preferred_element_type=jnp.float32)

        # Lane-aligned split into Re / Im halves (k_pad is a multiple of 128).
        x_mag = jnp.sqrt(jnp.maximum(
            xs[:, :k_pad] * xs[:, :k_pad] + xs[:, k_pad:] * xs[:, k_pad:], eps))
        y_mag = jnp.sqrt(jnp.maximum(
            ys[:, :k_pad] * ys[:, :k_pad] + ys[:, k_pad:] * ys[:, k_pad:], eps))

        # Pure-VPU elementwise accumulation; no cross-lane work per step.
        diff = y_mag - x_mag
        acc_d[...] += diff * diff
        acc_y[...] += y_mag * y_mag
        acc_l[...] += jnp.abs(jnp.log(x_mag) - jnp.log(y_mag))

        # Single cross-lane reduction per slice, only on the last step.
        @pl.when(k == pl.num_programs(1) - 1)
        def _finalize():
            sqdiff_ref[...] = jnp.sum(acc_d[...], keepdims=True).reshape(1, 1, 1)
            sqy_ref[...] = jnp.sum(acc_y[...], keepdims=True).reshape(1, 1, 1)
            abslog_ref[...] = jnp.sum(acc_l[...], keepdims=True).reshape(1, 1, 1)

    return kernel


def stft_loss(x, y, fft_size: int, shift_length: int, win_length: int, *,
              block_frames: int = 256, num_parallel: int = 2, eps: float = 1e-7):
    """Pallas equivalent of STFTLoss.forward(x, y) -> (sc_loss, mag_loss)."""
    assert x.shape == y.shape and x.ndim == 2, "expected (batch, samples) inputs"
    assert win_length <= fft_size
    B, _ = x.shape
    n_fft = fft_size
    hop = shift_length
    K = n_fft // 2 + 1
    k_pad = _round_up(K, 128)          # lane-aligned frequency width

    f32 = jnp.float32
    bf16 = jnp.bfloat16
    x = x.astype(f32)
    y = y.astype(f32)

    # Hann window (periodic, torch.hann_window default), centered zero-padded
    # to n_fft like torch.stft does when win_length < n_fft.
    n = jnp.arange(win_length, dtype=f32)
    win = 0.5 * (1.0 - jnp.cos(2.0 * jnp.pi * n / win_length))
    lpad = (n_fft - win_length) // 2
    win = jnp.pad(win, (lpad, n_fft - win_length - lpad))

    # Fused window-folded real-DFT basis: [cos | -sin], zero-padded to k_pad bins.
    t = jnp.arange(n_fft, dtype=f32)[:, None]
    kk = jnp.arange(K, dtype=f32)[None, :]
    ang = 2.0 * jnp.pi * t * kk / n_fft
    cosw = jnp.pad(win[:, None] * jnp.cos(ang), ((0, 0), (0, k_pad - K)))
    sinw = jnp.pad(win[:, None] * (-jnp.sin(ang)), ((0, 0), (0, k_pad - K)))
    basis = jnp.concatenate([cosw, sinw], axis=1).astype(bf16)   # (n_fft, 2*k_pad)

    # Centered reflect padding + framing (torch.stft center=True defaults).
    # TODO(synk): for hop << n_fft on v5e, DMA raw signal chunks and build the
    # frames in VMEM instead of materializing the 4x-overlapped frame matrix.
    pad = n_fft // 2
    xp = jnp.pad(x, ((0, 0), (pad, pad)), mode="reflect")
    yp = jnp.pad(y, ((0, 0), (pad, pad)), mode="reflect")
    num_frames = 1 + (xp.shape[1] - n_fft) // hop
    idx = (jnp.arange(num_frames)[:, None] * hop
           + jnp.arange(n_fft)[None, :])                         # (F, n_fft)
    xf = xp[:, idx].reshape(B * num_frames, n_fft).astype(bf16)
    yf = yp[:, idx].reshape(B * num_frames, n_fft).astype(bf16)

    total = B * num_frames

    # Frame tile: multiple of 16 sublanes (bf16 packing), at most block_frames.
    tf = _round_up(min(block_frames, max(total, 1)), 16)
    n_slices = max(1, min(num_parallel, pl.cdiv(total, tf)))
    padded = _round_up(total, tf * n_slices)
    bps = padded // (tf * n_slices)       # reduction steps per parallel slice
    xf = jnp.pad(xf, ((0, padded - total), (0, 0)))
    yf = jnp.pad(yf, ((0, padded - total), (0, 0)))

    kernel = _make_stft_loss_kernel(k_pad, eps)
    out_shape = tuple(jax.ShapeDtypeStruct((n_slices, 1, 1), f32) for _ in range(3))
    out_specs = [pl.BlockSpec((1, 1, 1), lambda p, k: (p, 0, 0)) for _ in range(3)]
    frame_spec = pl.BlockSpec((tf, n_fft), lambda p, k: (p * bps + k, 0))

    cost = pl.CostEstimate(
        flops=8 * padded * n_fft * k_pad,
        transcendentals=4 * padded * k_pad,
        bytes_accessed=(2 * padded * n_fft * 2          # bf16 frames (x and y)
                        + n_fft * 2 * k_pad * 2          # bf16 basis
                        + 3 * n_slices * 4),             # scalar partials
    )

    sq_diff, sq_y, abs_log = pl.pallas_call(
        kernel,
        out_shape=out_shape,
        grid_spec=pltpu.PrefetchScalarGridSpec(
            num_scalar_prefetch=0,
            grid=(n_slices, bps),
            in_specs=[
                frame_spec,                                   # x frames (bf16)
                frame_spec,                                   # y frames (bf16)
                # Constant index_map; could additionally be single-buffered to
                # halve its VMEM footprint for very large n_fft.
                pl.BlockSpec((n_fft, 2 * k_pad), lambda p, k: (0, 0)),
            ],
            out_specs=out_specs,
            scratch_shapes=[pltpu.VMEM((tf, k_pad), f32)] * 3,
        ),
        compiler_params=pltpu.CompilerParams(
            dimension_semantics=("parallel", "arbitrary"),
            vmem_limit_bytes=64 * 1024 * 1024,
        ),
        cost_estimate=cost,
    )(xf, yf, basis)

    sq_diff = jnp.sum(sq_diff)     # combine per-slice partials
    sq_y = jnp.sum(sq_y)
    abs_log = jnp.sum(abs_log)

    # Exact removal of the padded rows'/columns' contribution: every padded
    # element has Re = Im = 0 exactly (zero frames / zero basis columns), hence
    # adds exactly sqrt(eps)^2 to sum(y_mag^2) and exactly 0 to the other sums.
    pad_elems = padded * k_pad - total * K
    eps_term = jnp.square(jnp.sqrt(jnp.asarray(eps, f32)))
    sq_y = jnp.maximum(sq_y - eps_term * pad_elems, 0.0)

    sc_loss = jnp.sqrt(sq_diff) / jnp.sqrt(sq_y)
    mag_loss = abs_log / float(total * K)
    return sc_loss, mag_loss


def _reference_stft_loss(x, y, fft_size, shift_length, win_length, eps=1e-7):
    """Pure-JAX reference using jnp.fft.rfft (mirrors the torch module)."""
    B, _ = x.shape
    n_fft, hop = fft_size, shift_length
    f32 = jnp.float32
    n = jnp.arange(win_length, dtype=f32)
    win = 0.5 * (1.0 - jnp.cos(2.0 * jnp.pi * n / win_length))
    lpad = (n_fft - win_length) // 2
    win = jnp.pad(win, (lpad, n_fft - win_length - lpad))
    pad = n_fft // 2

    def mags(sig):
        sp = jnp.pad(sig.astype(f32), ((0, 0), (pad, pad)), mode="reflect")
        num_frames = 1 + (sp.shape[1] - n_fft) // hop
        idx = (jnp.arange(num_frames)[:, None] * hop
               + jnp.arange(n_fft)[None, :])
        frames = sp[:, idx] * win[None, None, :]
        spec = jnp.fft.rfft(frames, axis=-1)
        power = jnp.real(spec) ** 2 + jnp.imag(spec) ** 2
        return jnp.sqrt(jnp.maximum(power, eps))

    xm, ym = mags(x), mags(y)
    sc = jnp.linalg.norm((ym - xm).ravel()) / jnp.linalg.norm(ym.ravel())
    mg = jnp.mean(jnp.abs(jnp.log(xm) - jnp.log(ym)))
    return sc, mg


if __name__ == "__main__":
    key = jax.random.PRNGKey(0)
    kx, ky = jax.random.split(key)

    B, T = 2, 1024
    fft_size, shift_length, win_length = 128, 32, 128

    x = jax.random.normal(kx, (B, T), dtype=jnp.float32)
    y = jax.random.normal(ky, (B, T), dtype=jnp.float32)

    # block_frames=32 is deliberately small so the tiny demo exercises the
    # multi-step accumulation AND the 2-slice parallel path; for real sizes
    # leave the larger default.
    sc_loss, mag_loss = stft_loss(x, y, fft_size, shift_length, win_length,
                                  block_frames=32)
    sc_loss, mag_loss = jax.block_until_ready((sc_loss, mag_loss))

    sc_ref, mag_ref = _reference_stft_loss(x, y, fft_size, shift_length, win_length)

    assert jnp.isfinite(sc_loss) and jnp.isfinite(mag_loss)
    assert jnp.allclose(sc_loss, sc_ref, rtol=2e-2, atol=1e-3), (sc_loss, sc_ref)
    assert jnp.allclose(mag_loss, mag_ref, rtol=2e-2, atol=1e-3), (mag_loss, mag_ref)

    print("KERNEL_OK")
</pallas_src>

<mosaic_0001>
module attributes {stable_mosaic.version = 11 : i64} {
  func.func @kernel(%arg0: i32, %arg1: i32, %arg2: memref<32x128xbf16, #tpu.memory_space<vmem>>, %arg3: memref<32x128xbf16, #tpu.memory_space<vmem>>, %arg4: memref<128x256xbf16, #tpu.memory_space<vmem>>, %arg5: memref<1x1x1xf32, #tpu.memory_space<vmem>>, %arg6: memref<1x1x1xf32, #tpu.memory_space<vmem>>, %arg7: memref<1x1x1xf32, #tpu.memory_space<vmem>>, %arg8: memref<32x128xf32, #tpu.memory_space<vmem>>, %arg9: memref<32x128xf32, #tpu.memory_space<vmem>>, %arg10: memref<32x128xf32, #tpu.memory_space<vmem>>) attributes {dimension_semantics = [#tpu.dimension_semantics<parallel>, #tpu.dimension_semantics<arbitrary>], iteration_bounds = array<i64: 2, 2>, scalar_prefetch = 0 : i64, scratch_operands = 3 : i64, tpu.core_type = #tpu.core_type<tc>, window_params = [{transform_indices = @transform_0, window_bounds = array<i64: 32, 128>}, {transform_indices = @transform_1, window_bounds = array<i64: 32, 128>}, {pipeline_mode = #tpu.pipeline_mode<synchronous>, transform_indices = @transform_2, window_bounds = array<i64: 128, 256>}, {transform_indices = @transform_3, window_bounds = array<i64: 1, 1, 1>}, {transform_indices = @transform_4, window_bounds = array<i64: 1, 1, 1>}, {transform_indices = @transform_5, window_bounds = array<i64: 1, 1, 1>}]} {
    %c0_i32 = arith.constant 0 : i32
    %0 = arith.cmpi eq, %arg1, %c0_i32 : i32
    %1 = arith.extui %0 : i1 to i32
    %c0_i32_0 = arith.constant 0 : i32
    %2 = arith.cmpi ne, %1, %c0_i32_0 : i32
    scf.if %2 {
      %cst_22 = arith.constant 0.000000e+00 : f32
      %47 = vector.broadcast %cst_22 : f32 to vector<32x128xf32>
      %c0_23 = arith.constant 0 : index
      %c0_24 = arith.constant 0 : index
      %48 = vector.load %arg8[%c0_23, %c0_24] : memref<32x128xf32, #tpu.memory_space<vmem>>, vector<32x128xf32>
      tpu.vector_store %arg8[%c0_23, %c0_24], %47 {strides = array<i32>} : memref<32x128xf32, #tpu.memory_space<vmem>>, vector<32x128xf32>,
      %cst_25 = arith.constant 0.000000e+00 : f32
      %49 = vector.broadcast %cst_25 : f32 to vector<32x128xf32>
      %c0_26 = arith.constant 0 : index
      %c0_27 = arith.constant 0 : index
      %50 = vector.load %arg9[%c0_26, %c0_27] : memref<32x128xf32, #tpu.memory_space<vmem>>, vector<32x128xf32>
      tpu.vector_store %arg9[%c0_26, %c0_27], %49 {strides = array<i32>} : memref<32x128xf32, #tpu.memory_space<vmem>>, vector<32x128xf32>,
      %cst_28 = arith.constant 0.000000e+00 : f32
      %51 = vector.broadcast %cst_28 : f32 to vector<32x128xf32>
      %c0_29 = arith.constant 0 : index
      %c0_30 = arith.constant 0 : index
      %52 = vector.load %arg10[%c0_29, %c0_30] : memref<32x128xf32, #tpu.memory_space<vmem>>, vector<32x128xf32>
      tpu.vector_store %arg10[%c0_29, %c0_30], %51 {strides = array<i32>} : memref<32x128xf32, #tpu.memory_space<vmem>>, vector<32x128xf32>,
    } else {
    }
    %c0 = arith.constant 0 : index
    %c0_1 = arith.constant 0 : index
    %3 = vector.load %arg4[%c0, %c0_1] : memref<128x256xbf16, #tpu.memory_space<vmem>>, vector<128x256xbf16>
    %c0_2 = arith.constant 0 : index
    %c0_3 = arith.constant 0 : index
    %4 = vector.load %arg2[%c0_2, %c0_3] : memref<32x128xbf16, #tpu.memory_space<vmem>>, vector<32x128xbf16>
    %cst = arith.constant dense<0.000000e+00> : vector<32x256xf32>
    %5 = tpu.matmul %4, %3, %cst {dimension_numbers = #tpu.dot_dimension_numbers<[1], [0], [0], [1], [0, 0, 1, 1], [], []>} : vector<32x128xbf16>, vector<128x256xbf16>, vector<32x256xf32> -> vector<32x256xf32>
    %c0_4 = arith.constant 0 : index
    %c0_5 = arith.constant 0 : index
    %6 = vector.load %arg3[%c0_4, %c0_5] : memref<32x128xbf16, #tpu.memory_space<vmem>>, vector<32x128xbf16>
    %cst_6 = arith.constant dense<0.000000e+00> : vector<32x256xf32>
    %7 = tpu.matmul %6, %3, %cst_6 {dimension_numbers = #tpu.dot_dimension_numbers<[1], [0], [0], [1], [0, 0, 1, 1], [], []>} : vector<32x128xbf16>, vector<128x256xbf16>, vector<32x256xf32> -> vector<32x256xf32>
    %8 = vector.extract_strided_slice %5 {offsets = [0, 0], sizes = [32, 128], strides = [1, 1]} : vector<32x256xf32> to vector<32x128xf32>
    %9 = vector.extract_strided_slice %5 {offsets = [0, 0], sizes = [32, 128], strides = [1, 1]} : vector<32x256xf32> to vector<32x128xf32>
    %10 = arith.mulf %8, %9 : vector<32x128xf32>
    %11 = vector.extract_strided_slice %5 {offsets = [0, 128], sizes = [32, 128], strides = [1, 1]} : vector<32x256xf32> to vector<32x128xf32>
    %12 = vector.extract_strided_slice %5 {offsets = [0, 128], sizes = [32, 128], strides = [1, 1]} : vector<32x256xf32> to vector<32x128xf32>
    %13 = arith.mulf %11, %12 : vector<32x128xf32>
    %14 = arith.addf %10, %13 : vector<32x128xf32>
    %cst_7 = arith.constant 1.000000e-07 : f32
    %15 = vector.broadcast %cst_7 : f32 to vector<32x128xf32>
    %16 = arith.maximumf %14, %15 : vector<32x128xf32>
    %17 = math.sqrt %16 : vector<32x128xf32>
    %18 = vector.extract_strided_slice %7 {offsets = [0, 0], sizes = [32, 128], strides = [1, 1]} : vector<32x256xf32> to vector<32x128xf32>
    %19 = vector.extract_strided_slice %7 {offsets = [0, 0], sizes = [32, 128], strides = [1, 1]} : vector<32x256xf32> to vector<32x128xf32>
    %20 = arith.mulf %18, %19 : vector<32x128xf32>
    %21 = vector.extract_strided_slice %7 {offsets = [0, 128], sizes = [32, 128], strides = [1, 1]} : vector<32x256xf32> to vector<32x128xf32>
    %22 = vector.extract_strided_slice %7 {offsets = [0, 128], sizes = [32, 128], strides = [1, 1]} : vector<32x256xf32> to vector<32x128xf32>
    %23 = arith.mulf %21, %22 : vector<32x128xf32>
    %24 = arith.addf %20, %23 : vector<32x128xf32>
    %cst_8 = arith.constant 1.000000e-07 : f32
    %25 = vector.broadcast %cst_8 : f32 to vector<32x128xf32>
    %26 = arith.maximumf %24, %25 : vector<32x128xf32>
    %27 = math.sqrt %26 : vector<32x128xf32>
    %28 = arith.subf %27, %17 : vector<32x128xf32>
    %c0_9 = arith.constant 0 : index
    %c0_10 = arith.constant 0 : index
    %29 = vector.load %arg8[%c0_9, %c0_10] : memref<32x128xf32, #tpu.memory_space<vmem>>, vector<32x128xf32>
    %30 = arith.mulf %28, %28 : vector<32x128xf32>
    %31 = arith.addf %29, %30 : vector<32x128xf32>
    %c0_11 = arith.constant 0 : index
    %c0_12 = arith.constant 0 : index
    %32 = vector.load %arg8[%c0_11, %c0_12] : memref<32x128xf32, #tpu.memory_space<vmem>>, vector<32x128xf32>
    tpu.vector_store %arg8[%c0_11, %c0_12], %31 {strides = array<i32>} : memref<32x128xf32, #tpu.memory_space<vmem>>, vector<32x128xf32>,
    %c0_13 = arith.constant 0 : index
    %c0_14 = arith.constant 0 : index
    %33 = vector.load %arg9[%c0_13, %c0_14] : memref<32x128xf32, #tpu.memory_space<vmem>>, vector<32x128xf32>
    %34 = arith.mulf %27, %27 : vector<32x128xf32>
    %35 = arith.addf %33, %34 : vector<32x128xf32>
    %c0_15 = arith.constant 0 : index
    %c0_16 = arith.constant 0 : index
    %36 = vector.load %arg9[%c0_15, %c0_16] : memref<32x128xf32, #tpu.memory_space<vmem>>, vector<32x128xf32>
    tpu.vector_store %arg9[%c0_15, %c0_16], %35 {strides = array<i32>} : memref<32x128xf32, #tpu.memory_space<vmem>>, vector<32x128xf32>,
    %c0_17 = arith.constant 0 : index
    %c0_18 = arith.constant 0 : index
    %37 = vector.load %arg10[%c0_17, %c0_18] : memref<32x128xf32, #tpu.memory_space<vmem>>, vector<32x128xf32>
    %38 = math.log %17 : vector<32x128xf32>
    %39 = math.log %27 : vector<32x128xf32>
    %40 = arith.subf %38, %39 : vector<32x128xf32>
    %41 = math.absf %40 : vector<32x128xf32>
    %42 = arith.addf %37, %41 : vector<32x128xf32>
    %c0_19 = arith.constant 0 : index
    %c0_20 = arith.constant 0 : index
    %43 = vector.load %arg10[%c0_19, %c0_20] : memref<32x128xf32, #tpu.memory_space<vmem>>, vector<32x128xf32>
    tpu.vector_store %arg10[%c0_19, %c0_20], %42 {strides = array<i32>} : memref<32x128xf32, #tpu.memory_space<vmem>>, vector<32x128xf32>,
    %c1_i32 = arith.constant 1 : i32
    %44 = arith.cmpi eq, %arg1, %c1_i32 : i32
    %45 = arith.extui %44 : i1 to i32
    %c0_i32_21 = arith.constant 0 : i32
    %46 = arith.cmpi ne, %45, %c0_i32_21 : i32
    scf.if %46 {
      %c0_22 = arith.constant 0 : index
      %c0_23 = arith.constant 0 : index
      %47 = vector.load %arg8[%c0_22, %c0_23] : memref<32x128xf32, #tpu.memory_space<vmem>>, vector<32x128xf32>
      %48 = vector.shape_cast %47 : vector<32x128xf32> to vector<1x32x128xf32>
      %cst_24 = arith.constant dense<0.000000e+00> : vector<1xf32>
      %49 = vector.multi_reduction <add>, %48, %cst_24 [1, 2] : vector<1x32x128xf32> to vector<1xf32>
      %50 = vector.shape_cast %49 : vector<1xf32> to vector<1x1x1xf32>
      %51 = vector.extract %50[0, 0, 0] : f32 from vector<1x1x1xf32>
      %52 = vector.broadcast %51 : f32 to vector<1x1xf32>
      %53 = vector.shape_cast %52 : vector<1x1xf32> to vector<1x1x1xf32>
      %c0_25 = arith.constant 0 : index
      %c0_26 = arith.constant 0 : index
      %c0_27 = arith.constant 0 : index
      %54 = vector.load %arg5[%c0_25, %c0_26, %c0_27] : memref<1x1x1xf32, #tpu.memory_space<vmem>>, vector<1x1x1xf32>
      tpu.vector_store %arg5[%c0_25, %c0_26, %c0_27], %53 {strides = array<i32>} : memref<1x1x1xf32, #tpu.memory_space<vmem>>, vector<1x1x1xf32>,
      %c0_28 = arith.constant 0 : index
      %c0_29 = arith.constant 0 : index
      %55 = vector.load %arg9[%c0_28, %c0_29] : memref<32x128xf32, #tpu.memory_space<vmem>>, vector<32x128xf32>
      %56 = vector.shape_cast %55 : vector<32x128xf32> to vector<1x32x128xf32>
      %cst_30 = arith.constant dense<0.000000e+00> : vector<1xf32>
      %57 = vector.multi_reduction <add>, %56, %cst_30 [1, 2] : vector<1x32x128xf32> to vector<1xf32>
      %58 = vector.shape_cast %57 : vector<1xf32> to vector<1x1x1xf32>
      %59 = vector.extract %58[0, 0, 0] : f32 from vector<1x1x1xf32>
      %60 = vector.broadcast %59 : f32 to vector<1x1xf32>
      %61 = vector.shape_cast %60 : vector<1x1xf32> to vector<1x1x1xf32>
      %c0_31 = arith.constant 0 : index
      %c0_32 = arith.constant 0 : index
      %c0_33 = arith.constant 0 : index
      %62 = vector.load %arg6[%c0_31, %c0_32, %c0_33] : memref<1x1x1xf32, #tpu.memory_space<vmem>>, vector<1x1x1xf32>
      tpu.vector_store %arg6[%c0_31, %c0_32, %c0_33], %61 {strides = array<i32>} : memref<1x1x1xf32, #tpu.memory_space<vmem>>, vector<1x1x1xf32>,
      %c0_34 = arith.constant 0 : index
      %c0_35 = arith.constant 0 : index
      %63 = vector.load %arg10[%c0_34, %c0_35] : memref<32x128xf32, #tpu.memory_space<vmem>>, vector<32x128xf32>
      %64 = vector.shape_cast %63 : vector<32x128xf32> to vector<1x32x128xf32>
      %cst_36 = arith.constant dense<0.000000e+00> : vector<1xf32>
      %65 = vector.multi_reduction <add>, %64, %cst_36 [1, 2] : vector<1x32x128xf32> to vector<1xf32>
      %66 = vector.shape_cast %65 : vector<1xf32> to vector<1x1x1xf32>
      %67 = vector.extract %66[0, 0, 0] : f32 from vector<1x1x1xf32>
      %68 = vector.broadcast %67 : f32 to vector<1x1xf32>
      %69 = vector.shape_cast %68 : vector<1x1xf32> to vector<1x1x1xf32>
      %c0_37 = arith.constant 0 : index
      %c0_38 = arith.constant 0 : index
      %c0_39 = arith.constant 0 : index
      %70 = vector.load %arg7[%c0_37, %c0_38, %c0_39] : memref<1x1x1xf32, #tpu.memory_space<vmem>>, vector<1x1x1xf32>
      tpu.vector_store %arg7[%c0_37, %c0_38, %c0_39], %69 {strides = array<i32>} : memref<1x1x1xf32, #tpu.memory_space<vmem>>, vector<1x1x1xf32>,
    } else {
    }
    return
  }
  func.func @transform_0(%arg0: i32, %arg1: i32) -> (i32, i32) {
    %c2_i32 = arith.constant 2 : i32
    %0 = arith.muli %arg0, %c2_i32 : i32
    %1 = arith.addi %0, %arg1 : i32
    %c0_i32 = arith.constant 0 : i32
    %c0_i32_0 = arith.constant 0 : i32
    return %1, %c0_i32 : i32, i32
  }
  func.func @transform_1(%arg0: i32, %arg1: i32) -> (i32, i32) {
    %c2_i32 = arith.constant 2 : i32
    %0 = arith.muli %arg0, %c2_i32 : i32
    %1 = arith.addi %0, %arg1 : i32
    %c0_i32 = arith.constant 0 : i32
    %c0_i32_0 = arith.constant 0 : i32
    return %1, %c0_i32 : i32, i32
  }
  func.func @transform_2(%arg0: i32, %arg1: i32) -> (i32, i32) {
    %c0_i32 = arith.constant 0 : i32
    %c0_i32_0 = arith.constant 0 : i32
    %c0_i32_1 = arith.constant 0 : i32
    return %c0_i32, %c0_i32_0 : i32, i32
  }
  func.func @transform_3(%arg0: i32, %arg1: i32) -> (i32, i32, i32) {
    %c0_i32 = arith.constant 0 : i32
    %c0_i32_0 = arith.constant 0 : i32
    %c0_i32_1 = arith.constant 0 : i32
    return %arg0, %c0_i32, %c0_i32_0 : i32, i32, i32
  }
  func.func @transform_4(%arg0: i32, %arg1: i32) -> (i32, i32, i32) {
    %c0_i32 = arith.constant 0 : i32
    %c0_i32_0 = arith.constant 0 : i32
    %c0_i32_1 = arith.constant 0 : i32
    return %arg0, %c0_i32, %c0_i32_0 : i32, i32, i32
  }
  func.func @transform_5(%arg0: i32, %arg1: i32) -> (i32, i32, i32) {
    %c0_i32 = arith.constant 0 : i32
    %c0_i32_0 = arith.constant 0 : i32
    %c0_i32_1 = arith.constant 0 : i32
    return %arg0, %c0_i32, %c0_i32_0 : i32, i32, i32
  }
}

</mosaic_0001>

<llo_original>
// kernel: tpu_custom_call.1
$region0: #{tpu_custom_call.1}
  #allocation0 [shape = 'u32[]', space=smem, size = 0x4, offset = 0x4, fixed_abs, tag = 'smem constant byte address 0x4 - core index']
  #allocation1 [shape = 'u32[144,128]{1,0:T(1,128)}', space=vmem, size = 0x12000, scoped, tag = 'internal scratch']
  #allocation2 [shape = 'f32[32,128]{1,0:T(8,128)}', space=vmem, size = 0x4000, scoped, tag = 'scratch operand']
  #allocation3 [shape = 'f32[32,128]{1,0:T(8,128)}', space=vmem, size = 0x4000, scoped, tag = 'scratch operand']
  #allocation4 [shape = 'f32[32,128]{1,0:T(8,128)}', space=vmem, size = 0x4000, scoped, tag = 'scratch operand']
  %s0 = inlined_call_operand.hbm [shape: bf16[128,128], index: 0, kind: input, shape index: {}]
  %s1 = inlined_call_operand.hbm [shape: bf16[128,128], index: 1, kind: input, shape index: {}]
  %s2 = inlined_call_operand.hbm [shape: bf16[128,256], index: 2, kind: input, shape index: {}]
  %s3 = inlined_call_operand.hbm [shape: f32[2,1,1], index: 3, kind: output, shape index: {0}]
  %s4 = inlined_call_operand.hbm [shape: f32[2,1,1], index: 4, kind: output, shape index: {1}]
  %s5 = inlined_call_operand.hbm [shape: f32[2,1,1], index: 5, kind: output, shape index: {2}]
  %6 = xla_tuple %s3, %s4, %s5
  %s7 = sld [smem:[#allocation0]]
  $region81: #{tpu_custom_call.1} parent=0
    _
  %s9 = ssub.s32 1, %s7
  %s10 = scalar_select 0, %s9, %s7
  $region1: #{tpu_custom_call.1} parent=0
    #allocation5 [shape = 'u8[16384]{0}', space=vmem, size = 0x4000, scoped, tag = 'input window, operand 0']
    #allocation6 [shape = 's32[2]{0}', space=sflag, size = 0x8, scoped, tag = 'scoped memory for tpu_custom_call.1']
    #allocation7 [shape = 's32[2]{0}', space=sflag, size = 0x8, scoped, tag = 'scoped memory for tpu_custom_call.1']
    #allocation8 [shape = 'u8[16384]{0}', space=vmem, size = 0x4000, scoped, tag = 'input window, operand 1']
    #allocation9 [shape = 's32[2]{0}', space=sflag, size = 0x8, scoped, tag = 'scoped memory for tpu_custom_call.1']
    #allocation10 [shape = 'u8[65536]{0}', space=vmem, size = 0x10000, scoped, tag = 'input window, operand 2, single buffered']
    #allocation11 [shape = 'u8[1024]{0}', space=vmem, size = 0x400, scoped, tag = 'output window, operand 0']
    #allocation12 [shape = 'u8[1024]{0}', space=vmem, size = 0x400, scoped, tag = 'output window, operand 1']
    #allocation13 [shape = 's32[2]{0}', space=sflag, size = 0x8, scoped, tag = 'scoped memory for tpu_custom_call.1']
    #allocation14 [shape = 'u8[1024]{0}', space=vmem, size = 0x400, scoped, tag = 'output window, operand 2']
    %11 = vsyncpa [#allocation6], 0
    %s12 = scalar_lea.sflag [#allocation6], 1
    %13 = vsyncpa %s12, 0
    %14 = vsyncpa [#allocation9], 0
    %s15 = scalar_lea.sflag [#allocation9], 1
    %16 = vsyncpa %s15, 0
    %17 = vsyncpa [#allocation7], 0
    %s18 = scalar_lea.sflag [#allocation7], 1
    %19 = vsyncpa %s18, 0
    %20 = vsyncpa [#allocation13], 0
    %s21 = scalar_lea.sflag [#allocation13], 1
    %22 = vsyncpa %s21, 0
    loop: start=0, step=1, limit=6
    $region2: #{tpu_custom_call.1} parent=1 // loop_pre_header
      _
    $region3: #{tpu_custom_call.1} parent=1 // loop_header
      %s24 = sphi 0, %s28
      %p25 = scmp.ge.s32.totalorder %s24, 6
      %s31 = sphi 0, %s43
      %s32 = sphi 0, %s39
      %s33 = sphi 0, %s31
      %s34 = sphi 0, %s32
      %s35 = sphi 0, %s33
      %s36 = sphi 0, %s34
      %s50 = sphi 0, %s52
      %s53 = sphi 0, %s50
      %s54 = sphi 0, %s53
      %s70 = sphi 0, %s54
      %s80 = sphi 0, %s82
      %s83 = sphi 0, %s80
      %s84 = sphi 0, %s83
      %s100 = sphi 0, %s84
      %s104 = sphi 0, %s104
      %s106 = sphi 0, %s104
      %s107 = sphi 0, %s106
      %s121 = sphi 0, %s107
      %s127 = sphi 0, %s129
      %s130 = sphi 0, %s127
      %s131 = sphi 0, %s130
      %s147 = sphi 0, %s131
      %s153 = sphi 0, %s155
      %s156 = sphi 0, %s153
      %s157 = sphi 0, %s156
      %s173 = sphi 0, %s157
      %s179 = sphi 0, %s181
      %s182 = sphi 0, %s179
      %s183 = sphi 0, %s182
      %s199 = sphi 0, %s183
    $region4: #{tpu_custom_call.1} parent=1 // loop_header_branch
      %27 = sbr.rel (%p25) target = $region8
    $region5: #{tpu_custom_call.1} parent=1 // loop_body
      %s29 = ssub.s32 %s24, 1
      %s30 = ssub.s32 %s24, 2
      %s37 = sadd.s32 1, %s32
      %p38 = scmp.ge.s32.totalorder %s37, 2
      %s39 = scalar_select %p38, 0, %s37
      %s40 = sadd.s32 1, %s31
      %s41 = scalar_select %p38, %s40, %s31
      %p42 = scmp.ge.s32.totalorder %s41, 2
      %s43 = scalar_select %p42, 0, %s41
      %s44 = smul.u32 %s31, 2
      %s45 = sadd.s32 %s44, %s32
      %s46 = smul.u32 %s43, 2
      %s47 = sadd.s32 %s46, %s39
      %s48 = ssub.s32 %s45, %s47
      %p49 = scmp.eq.s32.totalorder %s48, 0
      %s51 = sadd.s32 %s50, 1
      %s52 = scalar_select %p49, %s50, %s51
      %p55 = pneg %p49
      %p56 = scmp.eq.s32.totalorder %s24, 3
      %p57 = por %p55, %p56
      %p58 = scmp.ne.s32.totalorder %s50, %s53
      %p59 = scmp.eq.s32.totalorder %s24, 0
      %p60 = por %p58, %p59
      %p61 = scmp.ne.s32.totalorder %s50, %s53
      %p62 = scmp.eq.s32.totalorder %s29, 3
      %p63 = por %p61, %p62
      %p64 = scmp.ne.s32.totalorder %s53, %s54
      %p65 = scmp.eq.s32.totalorder %s29, 0
      %p66 = por %p64, %p65
      %p67 = scmp.ne.s32.totalorder %s53, %s54
      %p68 = scmp.eq.s32.totalorder %s30, 3
      %p69 = por %p67, %p68
      %p71 = scmp.ne.s32.totalorder %s54, %s70
      %p72 = scmp.eq.s32.totalorder %s30, 0
      %p73 = por %p71, %p72
      %s74 = smul.u32 %s31, 2
      %s75 = sadd.s32 %s74, %s32
      %s76 = smul.u32 %s43, 2
      %s77 = sadd.s32 %s76, %s39
      %s78 = ssub.s32 %s75, %s77
      %p79 = scmp.eq.s32.totalorder %s78, 0
      %s81 = sadd.s32 %s80, 1
      %s82 = scalar_select %p79, %s80, %s81
      %p85 = pneg %p79
      %p86 = scmp.eq.s32.totalorder %s24, 3
      %p87 = por %p85, %p86
      %p88 = scmp.ne.s32.totalorder %s80, %s83
      %p89 = scmp.eq.s32.totalorder %s24, 0
      %p90 = por %p88, %p89
      %p91 = scmp.ne.s32.totalorder %s80, %s83
      %p92 = scmp.eq.s32.totalorder %s29, 3
      %p93 = por %p91, %p92
      %p94 = scmp.ne.s32.totalorder %s83, %s84
      %p95 = scmp.eq.s32.totalorder %s29, 0
      %p96 = por %p94, %p95
      %p97 = scmp.ne.s32.totalorder %s83, %s84
      %p98 = scmp.eq.s32.totalorder %s30, 3
      %p99 = por %p97, %p98
      %p101 = scmp.ne.s32.totalorder %s84, %s100
      %p102 = scmp.eq.s32.totalorder %s30, 0
      %p103 = por %p101, %p102
      %s105 = sadd.s32 %s104, 1
      %p108 = scmp.eq.s32.totalorder %s24, 3
      %p109 = scmp.ne.s32.totalorder %s104, %s106
      %p110 = scmp.eq.s32.totalorder %s24, 0
      %p111 = por %p109, %p110
      %p112 = scmp.ne.s32.totalorder %s104, %s106
      %p113 = scmp.eq.s32.totalorder %s29, 3
      %p114 = por %p112, %p113
      %p115 = scmp.ne.s32.totalorder %s106, %s107
      %p116 = scmp.eq.s32.totalorder %s29, 0
      %p117 = por %p115, %p116
      %p118 = scmp.ne.s32.totalorder %s106, %s107
      %p119 = scmp.eq.s32.totalorder %s30, 3
      %p120 = por %p118, %p119
      %p122 = scmp.ne.s32.totalorder %s107, %s121
      %p123 = scmp.eq.s32.totalorder %s30, 0
      %p124 = por %p122, %p123
      %s125 = ssub.s32 %s31, %s43
      %p126 = scmp.eq.s32.totalorder %s125, 0
      %s128 = sadd.s32 %s127, 1
      %s129 = scalar_select %p126, %s127, %s128
      %p132 = pneg %p126
      %p133 = scmp.eq.s32.totalorder %s24, 3
      %p134 = por %p132, %p133
      %p135 = scmp.ne.s32.totalorder %s127, %s130
      %p136 = scmp.eq.s32.totalorder %s24, 0
      %p137 = por %p135, %p136
      %p138 = scmp.ne.s32.totalorder %s127, %s130
      %p139 = scmp.eq.s32.totalorder %s29, 3
      %p140 = por %p138, %p139
      %p141 = scmp.ne.s32.totalorder %s130, %s131
      %p142 = scmp.eq.s32.totalorder %s29, 0
      %p143 = por %p141, %p142
      %p144 = scmp.ne.s32.totalorder %s130, %s131
      %p145 = scmp.eq.s32.totalorder %s30, 3
      %p146 = por %p144, %p145
      %p148 = scmp.ne.s32.totalorder %s131, %s147
      %p149 = scmp.eq.s32.totalorder %s30, 0
      %p150 = por %p148, %p149
      %s151 = ssub.s32 %s31, %s43
      %p152 = scmp.eq.s32.totalorder %s151, 0
      %s154 = sadd.s32 %s153, 1
      %s155 = scalar_select %p152, %s153, %s154
      %p158 = pneg %p152
      %p159 = scmp.eq.s32.totalorder %s24, 3
      %p160 = por %p158, %p159
      %p161 = scmp.ne.s32.totalorder %s153, %s156
      %p162 = scmp.eq.s32.totalorder %s24, 0
      %p163 = por %p161, %p162
      %p164 = scmp.ne.s32.totalorder %s153, %s156
      %p165 = scmp.eq.s32.totalorder %s29, 3
      %p166 = por %p164, %p165
      %p167 = scmp.ne.s32.totalorder %s156, %s157
      %p168 = scmp.eq.s32.totalorder %s29, 0
      %p169 = por %p167, %p168
      %p170 = scmp.ne.s32.totalorder %s156, %s157
      %p171 = scmp.eq.s32.totalorder %s30, 3
      %p172 = por %p170, %p171
      %p174 = scmp.ne.s32.totalorder %s157, %s173
      %p175 = scmp.eq.s32.totalorder %s30, 0
      %p176 = por %p174, %p175
      %s177 = ssub.s32 %s31, %s43
      %p178 = scmp.eq.s32.totalorder %s177, 0
      %s180 = sadd.s32 %s179, 1
      %s181 = scalar_select %p178, %s179, %s180
      %p184 = pneg %p178
      %p185 = scmp.eq.s32.totalorder %s24, 3
      %p186 = por %p184, %p185
      %p187 = scmp.ne.s32.totalorder %s179, %s182
      %p188 = scmp.eq.s32.totalorder %s24, 0
      %p189 = por %p187, %p188
      %p190 = scmp.ne.s32.totalorder %s179, %s182
      %p191 = scmp.eq.s32.totalorder %s29, 3
      %p192 = por %p190, %p191
      %p193 = scmp.ne.s32.totalorder %s182, %s183
      %p194 = scmp.eq.s32.totalorder %s29, 0
      %p195 = por %p193, %p194
      %p196 = scmp.ne.s32.totalorder %s182, %s183
      %p197 = scmp.eq.s32.totalorder %s30, 3
      %p198 = por %p196, %p197
      %p200 = scmp.ne.s32.totalorder %s183, %s199
      %p201 = scmp.eq.s32.totalorder %s30, 0
      %p202 = por %p200, %p201
      %p203 = scmp.le.s32.totalorder 1, %s24
      %p204 = scmp.lt.s32.totalorder %s24, 5
      %p205 = pnand %p203, %p204
      %p206 = pneg %p205
      // Predicated region
      $region9: #{tpu_custom_call.1} parent=5 // pred_check
        _
      $region10: #{tpu_custom_call.1} parent=5 // pred_check_branch
        %208 = sbr.rel (%p205) target = $region12
      $region11: #{tpu_custom_call.1} parent=5 // pred_region
        %s209 = ssub.s32 %s24, 1
        // Predicated region
        $region13: #{tpu_custom_call.1} parent=11 // pred_check
          %p210 = pneg %p117
        $region14: #{tpu_custom_call.1} parent=11 // pred_check_branch
          %212 = sbr.rel (%p210) target = $region16
        $region15: #{tpu_custom_call.1} parent=11 // pred_region
          %s214 = ssub.s32 2048, 2048
          %215 = vsyncadd [#allocation9], %s214
          %s216 = sshll.u32 [#allocation10], 4
          %s217 = int_to_ptr.vmem [resolvable:$true] %s216
          %222 = dma.hbm_to_vmem [thread:$0]  %s2, 2048, %s217, [#allocation9], 128, 128, 8
        $region16: #{tpu_custom_call.1} parent=11 // pred_fallthru
          _
      $region12: #{tpu_custom_call.1} parent=5 // pred_fallthru
        _
      %p223 = scmp.lt.s32.totalorder %s24, 4
      // Predicated region
      $region17: #{tpu_custom_call.1} parent=5 // pred_check
        %p224 = pneg %p223
      $region18: #{tpu_custom_call.1} parent=5 // pred_check_branch
        %226 = sbr.rel (%p224) target = $region20
      $region19: #{tpu_custom_call.1} parent=5 // pred_region
        // Predicated region
        $region21: #{tpu_custom_call.1} parent=19 // pred_check
          %p227 = pneg %p60
        $region22: #{tpu_custom_call.1} parent=19 // pred_check_branch
          %229 = sbr.rel (%p227) target = $region24
        $region23: #{tpu_custom_call.1} parent=19 // pred_region
          %s230 = sand.u32 %s50, 1
          %s231 = scalar_lea.sflag [#allocation6], %s230
          %s232 = sand.u32 %s50, 1
          %s233 = smul.addr %s232, 16
          %s234 = scalar_lea.vmem [#allocation5], %s233
          %s235 = smul.u32 %s31, 2
          %s236 = sadd.s32 %s235, %s32
          %s237 = smul.u32 4, %s236
          %s239 = ssub.s32 256, 256
          %240 = vsyncadd %s231, %s239
          %s241 = smul.addr %s237, 64
          %s242 = scalar_lea.hbm %s0, %s241
          %s243 = sshll.u32 %s234, 4
          %s244 = int_to_ptr.vmem [resolvable:$true] %s243
          %249 = dma.hbm_to_vmem [thread:$0]  %s242, 256, %s244, %s231, 64, 64, 4
        $region24: #{tpu_custom_call.1} parent=19 // pred_fallthru
          _
        // Predicated region
        $region25: #{tpu_custom_call.1} parent=19 // pred_check
          %p250 = pneg %p90
        $region26: #{tpu_custom_call.1} parent=19 // pred_check_branch
          %252 = sbr.rel (%p250) target = $region28
        $region27: #{tpu_custom_call.1} parent=19 // pred_region
          %s253 = sand.u32 %s24, 1
          %s254 = scalar_lea.sflag [#allocation9], %s253
          %s255 = sand.u32 %s80, 1
          %s256 = smul.addr %s255, 16
          %s257 = scalar_lea.vmem [#allocation8], %s256
          %s258 = smul.u32 %s31, 2
          %s259 = sadd.s32 %s258, %s32
          %s260 = smul.u32 4, %s259
          %s262 = ssub.s32 256, 256
          %263 = vsyncadd %s254, %s262
          %s264 = smul.addr %s260, 64
          %s265 = scalar_lea.hbm %s1, %s264
          %s266 = sshll.u32 %s257, 4
          %s267 = int_to_ptr.vmem [resolvable:$true] %s266
          %272 = dma.hbm_to_vmem [thread:$0]  %s265, 256, %s267, %s254, 64, 64, 4
        $region28: #{tpu_custom_call.1} parent=19 // pred_fallthru
          _
      $region20: #{tpu_custom_call.1} parent=5 // pred_fallthru
        _
      %p273 = scmp.le.s32.totalorder 1, %s24
      %p274 = scmp.lt.s32.totalorder %s24, 5
      %p275 = pnand %p273, %p274
      %p276 = pneg %p275
      // Predicated region
      $region29: #{tpu_custom_call.1} parent=5 // pred_check
        _
      $region30: #{tpu_custom_call.1} parent=5 // pred_check_branch
        %278 = sbr.rel (%p275) target = $region32
      $region31: #{tpu_custom_call.1} parent=5 // pred_region
        %s279 = ssub.s32 %s24, 1
        %s280 = sand.u32 %s53, 1
        %s281 = scalar_lea.sflag [#allocation6], %s280
        %s282 = sand.u32 %s53, 1
        %s283 = smul.addr %s282, 16
        %s284 = scalar_lea.vmem [#allocation5], %s283
        // Predicated region
        $region33: #{tpu_custom_call.1} parent=31 // pred_check
          %p285 = pneg %p66
        $region34: #{tpu_custom_call.1} parent=31 // pred_check_branch
          %287 = sbr.rel (%p285) target = $region36
        $region35: #{tpu_custom_call.1} parent=31 // pred_region
          %288 = dma.done %s281, 256
        $region36: #{tpu_custom_call.1} parent=31 // pred_fallthru
          _
        %s289 = sand.u32 %s29, 1
        %s290 = scalar_lea.sflag [#allocation9], %s289
        %s291 = sand.u32 %s83, 1
        %s292 = smul.addr %s291, 16
        %s293 = scalar_lea.vmem [#allocation8], %s292
        // Predicated region
        $region37: #{tpu_custom_call.1} parent=31 // pred_check
          %p294 = pneg %p96
        $region38: #{tpu_custom_call.1} parent=31 // pred_check_branch
          %296 = sbr.rel (%p294) target = $region40
        $region39: #{tpu_custom_call.1} parent=31 // pred_region
          %297 = dma.done %s290, 256
        $region40: #{tpu_custom_call.1} parent=31 // pred_fallthru
          _
        // Predicated region
        $region41: #{tpu_custom_call.1} parent=31 // pred_check
          %p298 = pneg %p117
        $region42: #{tpu_custom_call.1} parent=31 // pred_check_branch
          %300 = sbr.rel (%p298) target = $region44
        $region43: #{tpu_custom_call.1} parent=31 // pred_region
          %301 = dma.done [#allocation9], 2048
        $region44: #{tpu_custom_call.1} parent=31 // pred_fallthru
          _
        %s302 = sand.u32 %s53, 1
        %s303 = scalar_lea.sflag [#allocation6], %s302
        %s304 = sand.u32 %s53, 1
        %s305 = smul.addr %s304, 16
        %s306 = scalar_lea.vmem [#allocation5], %s305
        %p307 = pneg %p66
        %p308 = pneg %p63
        %s309 = sand.u32 %s29, 1
        %s310 = scalar_lea.sflag [#allocation9], %s309
        %s311 = sand.u32 %s83, 1
        %s312 = smul.addr %s311, 16
        %s313 = scalar_lea.vmem [#allocation8], %s312
        %p314 = pneg %p96
        %p315 = pneg %p93
        %p316 = pneg %p117
        %p317 = pneg %p114
        %p318 = pneg %p143
        %p319 = pneg %p140
        %s320 = sand.u32 %s130, 1
        %s321 = scalar_lea.sflag [#allocation7], %s320
        %s322 = sand.u32 %s130, 1
        %s323 = scalar_lea.vmem [#allocation11], %s322
        %p324 = pneg %p169
        %p325 = pneg %p166
        %s326 = sand.u32 %s29, 1
        %s327 = scalar_lea.sflag [#allocation13], %s326
        %s328 = sand.u32 %s156, 1
        %s329 = scalar_lea.vmem [#allocation12], %s328
        %p330 = pneg %p195
        %p331 = pneg %p192
        %s332 = sand.u32 %s29, 1
        %s333 = scalar_lea.sflag [#allocation13], %s332
        %s334 = sand.u32 %s182, 1
        %s335 = scalar_lea.vmem [#allocation14], %s334
        %s336 = smul.u32 %s33, 2
        %s337 = sadd.s32 %s336, %s34
        %s338 = smul.u32 4, %s337
        %s339 = smul.u32 %s33, 2
        %s340 = sadd.s32 %s339, %s34
        %s341 = smul.u32 4, %s340
        %p343 = scmp.eq.s32.totalorder %s34, 0
        // Predicated region
        $region45: #{tpu_custom_call.1} parent=31 // pred_check
          %p344 = pneg %p343
        $region46: #{tpu_custom_call.1} parent=31 // pred_check_branch
          %346 = sbr.rel (%p344) target = $region48
        $region47: #{tpu_custom_call.1} parent=31 // pred_region
          %347 = vst [vmem:[#allocation2] sm:$0xff] 0.0
          %348 = vst [vmem:[#allocation2 + $0x8] sm:$0xff] 0.0
          %349 = vst [vmem:[#allocation2 + $0x10] sm:$0xff] 0.0
          %350 = vst [vmem:[#allocation2 + $0x18] sm:$0xff] 0.0
          %351 = vst [vmem:[#allocation3] sm:$0xff] 0.0
          %352 = vst [vmem:[#allocation3 + $0x8] sm:$0xff] 0.0
          %353 = vst [vmem:[#allocation3 + $0x10] sm:$0xff] 0.0
          %354 = vst [vmem:[#allocation3 + $0x18] sm:$0xff] 0.0
          %355 = vst [vmem:[#allocation4] sm:$0xff] 0.0
          %356 = vst [vmem:[#allocation4 + $0x8] sm:$0xff] 0.0
          %357 = vst [vmem:[#allocation4 + $0x10] sm:$0xff] 0.0
          %358 = vst [vmem:[#allocation4 + $0x18] sm:$0xff] 0.0
        $region48: #{tpu_custom_call.1} parent=31 // pred_fallthru
          _
        %v359 = vld [vmem:[#allocation10] sm:$0xff]
        %v360 = vld [vmem:[#allocation10 + $0x8] sm:$0xff]
        %v361 = vld [vmem:[#allocation10 + $0x10] sm:$0xff]
        %v362 = vld [vmem:[#allocation10 + $0x18] sm:$0xff]
        %v363 = vld [vmem:[#allocation10 + $0x20] sm:$0xff]
        %v364 = vld [vmem:[#allocation10 + $0x28] sm:$0xff]
        %v365 = vld [vmem:[#allocation10 + $0x30] sm:$0xff]
        %v366 = vld [vmem:[#allocation10 + $0x38] sm:$0xff]
        %v367 = vld [vmem:[#allocation10 + $0x40] sm:$0xff]
        %v368 = vld [vmem:[#allocation10 + $0x48] sm:$0xff]
        %v369 = vld [vmem:[#allocation10 + $0x50] sm:$0xff]
        %v370 = vld [vmem:[#allocation10 + $0x58] sm:$0xff]
        %v371 = vld [vmem:[#allocation10 + $0x60] sm:$0xff]
        %v372 = vld [vmem:[#allocation10 + $0x68] sm:$0xff]
        %v373 = vld [vmem:[#allocation10 + $0x70] sm:$0xff]
        %v374 = vld [vmem:[#allocation10 + $0x78] sm:$0xff]
        %v375 = vld [vmem:[%s284] sm:$0xf]
        %v376 = vld [vmem:[%s284 + $0x4] sm:$0xf]
        %v377 = vld [vmem:[%s284 + $0x8] sm:$0xf]
        %v378 = vld [vmem:[%s284 + $0xc] sm:$0xf]
        %v383 = vunpack.c.l.b16 %v375
        %v384 = vunpack.c.l.b16 %v376
        %v385 = vunpack.c.l.b16 %v377
        %v386 = vunpack.c.l.b16 %v378
        %v387 = vpack.c.b16 %v384, %v383
        %v388 = vpack.c.b16 %v386, %v385
        %v407 = vunpack.c.l.b16 %v359
        %v408 = vunpack.c.h.b16 %v359
        %v409 = vunpack.c.l.b16 %v360
        %v410 = vunpack.c.h.b16 %v360
        %v411 = vunpack.c.l.b16 %v361
        %v412 = vunpack.c.h.b16 %v361
        %v413 = vunpack.c.l.b16 %v362
        %v414 = vunpack.c.h.b16 %v362
        %v415 = vunpack.c.l.b16 %v363
        %v416 = vunpack.c.h.b16 %v363
        %v417 = vunpack.c.l.b16 %v364
        %v418 = vunpack.c.h.b16 %v364
        %v419 = vunpack.c.l.b16 %v365
        %v420 = vunpack.c.h.b16 %v365
        %v421 = vunpack.c.l.b16 %v366
        %v422 = vunpack.c.h.b16 %v366
        %v423 = vunpack.c.l.b16 %v367
        %v424 = vunpack.c.h.b16 %v367
        %v425 = vunpack.c.l.b16 %v368
        %v426 = vunpack.c.h.b16 %v368
        %v427 = vunpack.c.l.b16 %v369
        %v428 = vunpack.c.h.b16 %v369
        %v429 = vunpack.c.l.b16 %v370
        %v430 = vunpack.c.h.b16 %v370
        %v431 = vunpack.c.l.b16 %v371
        %v432 = vunpack.c.h.b16 %v371
        %v433 = vunpack.c.l.b16 %v372
        %v434 = vunpack.c.h.b16 %v372
        %v435 = vunpack.c.l.b16 %v373
        %v436 = vunpack.c.h.b16 %v373
        %v437 = vunpack.c.l.b16 %v374
        %v438 = vunpack.c.h.b16 %v374
        %v439 = vpack.c.b16 %v409, %v407
        %v440 = vpack.c.b16 %v410, %v408
        %v441 = vpack.c.b16 %v413, %v411
        %v442 = vpack.c.b16 %v414, %v412
        %v443 = vpack.c.b16 %v417, %v415
        %v444 = vpack.c.b16 %v418, %v416
        %v445 = vpack.c.b16 %v421, %v419
        %v446 = vpack.c.b16 %v422, %v420
        %v447 = vpack.c.b16 %v425, %v423
        %v448 = vpack.c.b16 %v426, %v424
        %v449 = vpack.c.b16 %v429, %v427
        %v450 = vpack.c.b16 %v430, %v428
        %v451 = vpack.c.b16 %v433, %v431
        %v452 = vpack.c.b16 %v434, %v432
        %v453 = vpack.c.b16 %v437, %v435
        %v454 = vpack.c.b16 %v438, %v436
        %471 = vmatprep.subr.bf16.mxu0 %v440
        %472 = vmatpush1.bf16.msra.mxu0 %v439
        %473 = vmatprep.subr.bf16.mxu0 %v442
        %474 = vmatpush1.bf16.msra.mxu0 %v441
        %475 = vmatprep.subr.bf16.mxu0 %v444
        %476 = vmatpush1.bf16.msra.mxu0 %v443
        %477 = vmatprep.subr.bf16.mxu0 %v446
        %478 = vmatpush1.bf16.msra.mxu0 %v445
        %479 = vmatprep.subr.bf16.mxu0 %v448
        %480 = vmatpush1.bf16.msra.mxu0 %v447
        %481 = vmatprep.subr.bf16.mxu0 %v450
        %482 = vmatpush1.bf16.msra.mxu0 %v449
        %483 = vmatprep.subr.bf16.mxu0 %v452
        %484 = vmatpush1.bf16.msra.mxu0 %v451
        %485 = vmatprep.subr.bf16.mxu0 %v454
        %486 = vmatpush1.bf16.msra.mxu0 %v453
        %487 = vmatprep.subr.bf16.mxu0 0
        %488 = vmatpush1.bf16.msra.mxu0 0
        %489 = vmatprep.subr.bf16.mxu0 0
        %490 = vmatpush1.bf16.msra.mxu0 0
        %491 = vmatprep.subr.bf16.mxu0 0
        %492 = vmatpush1.bf16.msra.mxu0 0
        %493 = vmatprep.subr.bf16.mxu0 0
        %494 = vmatpush1.bf16.msra.mxu0 0
        %495 = vmatprep.subr.bf16.mxu0 0
        %496 = vmatpush1.bf16.msra.mxu0 0
        %497 = vmatprep.subr.bf16.mxu0 0
        %498 = vmatpush1.bf16.msra.mxu0 0
        %499 = vmatprep.subr.bf16.mxu0 0
        %500 = vmatpush1.bf16.msra.mxu0 0
        %501 = vmatprep.subr.bf16.mxu0 0
        %502 = vmatpush1.bf16.msra.mxu0 0
        %503 = vmatprep.mubr.bf16.mxu0 0
        %504 = vmatmul.mubr.bf16.gmra.mrb[0].mxu0 %v387
        %v505 = vpop.f32.mrb[0].mxu0
        %v506 = vadd.f32 0.0, %v505
        %v507 = vpop.f32.mrb[0].mxu0
        %v508 = vadd.f32 0.0, %v507
        %v509 = vpop.f32.mrb[0].mxu0
        %v510 = vadd.f32 0.0, %v509
        %v511 = vpop.f32.mrb[0].mxu0
        %v512 = vadd.f32 0.0, %v511
        %513 = vmatprep.mubr.bf16.mxu0 0
        %514 = vmatmul.mubr.bf16.gmra.mrb[0].mxu0 %v388
        %v515 = vpop.f32.mrb[0].mxu0
        %v516 = vadd.f32 0.0, %v515
        %v517 = vpop.f32.mrb[0].mxu0
        %v518 = vadd.f32 0.0, %v517
        %v519 = vpop.f32.mrb[0].mxu0
        %v520 = vadd.f32 0.0, %v519
        %v521 = vpop.f32.mrb[0].mxu0
        %v522 = vadd.f32 0.0, %v521
        %523 = vdwg.mxu0
        %v524 = vld [vmem:[%s293] sm:$0xf]
        %v525 = vld [vmem:[%s293 + $0x4] sm:$0xf]
        %v526 = vld [vmem:[%s293 + $0x8] sm:$0xf]
        %v527 = vld [vmem:[%s293 + $0xc] sm:$0xf]
        %v532 = vunpack.c.l.b16 %v524
        %v533 = vunpack.c.l.b16 %v525
        %v534 = vunpack.c.l.b16 %v526
        %v535 = vunpack.c.l.b16 %v527
        %v536 = vpack.c.b16 %v533, %v532
        %v537 = vpack.c.b16 %v535, %v534
        %540 = vmatprep.subr.bf16.mxu0 %v440
        %541 = vmatpush1.bf16.msra.mxu0 %v439
        %542 = vmatprep.subr.bf16.mxu0 %v442
        %543 = vmatpush1.bf16.msra.mxu0 %v441
        %544 = vmatprep.subr.bf16.mxu0 %v444
        %545 = vmatpush1.bf16.msra.mxu0 %v443
        %546 = vmatprep.subr.bf16.mxu0 %v446
        %547 = vmatpush1.bf16.msra.mxu0 %v445
        %548 = vmatprep.subr.bf16.mxu0 %v448
        %549 = vmatpush1.bf16.msra.mxu0 %v447
        %550 = vmatprep.subr.bf16.mxu0 %v450
        %551 = vmatpush1.bf16.msra.mxu0 %v449
        %552 = vmatprep.subr.bf16.mxu0 %v452
        %553 = vmatpush1.bf16.msra.mxu0 %v451
        %554 = vmatprep.subr.bf16.mxu0 %v454
        %555 = vmatpush1.bf16.msra.mxu0 %v453
        %556 = vmatprep.subr.bf16.mxu0 0
        %557 = vmatpush1.bf16.msra.mxu0 0
        %558 = vmatprep.subr.bf16.mxu0 0
        %559 = vmatpush1.bf16.msra.mxu0 0
        %560 = vmatprep.subr.bf16.mxu0 0
        %561 = vmatpush1.bf16.msra.mxu0 0
        %562 = vmatprep.subr.bf16.mxu0 0
        %563 = vmatpush1.bf16.msra.mxu0 0
        %564 = vmatprep.subr.bf16.mxu0 0
        %565 = vmatpush1.bf16.msra.mxu0 0
        %566 = vmatprep.subr.bf16.mxu0 0
        %567 = vmatpush1.bf16.msra.mxu0 0
        %568 = vmatprep.subr.bf16.mxu0 0
        %569 = vmatpush1.bf16.msra.mxu0 0
        %570 = vmatprep.subr.bf16.mxu0 0
        %571 = vmatpush1.bf16.msra.mxu0 0
        %572 = vmatprep.mubr.bf16.mxu0 0
        %573 = vmatmul.mubr.bf16.gmra.mrb[0].mxu0 %v536
        %v574 = vpop.f32.mrb[0].mxu0
        %v575 = vadd.f32 0.0, %v574
        %v576 = vpop.f32.mrb[0].mxu0
        %v577 = vadd.f32 0.0, %v576
        %v578 = vpop.f32.mrb[0].mxu0
        %v579 = vadd.f32 0.0, %v578
        %v580 = vpop.f32.mrb[0].mxu0
        %v581 = vadd.f32 0.0, %v580
        %582 = vmatprep.mubr.bf16.mxu0 0
        %583 = vmatmul.mubr.bf16.gmra.mrb[0].mxu0 %v537
        %v584 = vpop.f32.mrb[0].mxu0
        %v585 = vadd.f32 0.0, %v584
        %v586 = vpop.f32.mrb[0].mxu0
        %v587 = vadd.f32 0.0, %v586
        %v588 = vpop.f32.mrb[0].mxu0
        %v589 = vadd.f32 0.0, %v588
        %v590 = vpop.f32.mrb[0].mxu0
        %v591 = vadd.f32 0.0, %v590
        %592 = vdwg.mxu0
        %v593 = vmul.f32 %v506, %v506
        %v594 = vmul.f32 %v510, %v510
        %v595 = vmul.f32 %v516, %v516
        %v596 = vmul.f32 %v520, %v520
        %v597 = vmul.f32 %v508, %v508
        %v598 = vmul.f32 %v512, %v512
        %v599 = vmul.f32 %v518, %v518
        %v600 = vmul.f32 %v522, %v522
        %v601 = vadd.f32 %v593, %v597
        %v602 = vadd.f32 %v594, %v598
        %v603 = vadd.f32 %v595, %v599
        %v604 = vadd.f32 %v596, %v600
        %v605 = vmax.f32 %v601, 1e-07
        %v606 = vmax.f32 %v602, 1e-07
        %v607 = vmax.f32 %v603, 1e-07
        %v608 = vmax.f32 %v604, 1e-07
        %v609 = vrsqrt.pop %v605
        %v610 = vmul.f32 %v605, %v609
        %vm611 = vcmp.eq.f32.partialorder %v605, inf
        %v612 = vsel %vm611, %v605, %v610
        %vm613 = vcmp.eq.f32.partialorder %v605, 0.0
        %v614 = vand.u32 %v605, 2147483648
        %v615 = vsel %vm613, %v614, %v612
        %v616 = vrsqrt.pop %v606
        %v617 = vmul.f32 %v606, %v616
        %vm618 = vcmp.eq.f32.partialorder %v606, inf
        %v619 = vsel %vm618, %v606, %v617
        %vm620 = vcmp.eq.f32.partialorder %v606, 0.0
        %v621 = vand.u32 %v606, 2147483648
        %v622 = vsel %vm620, %v621, %v619
        %v623 = vrsqrt.pop %v607
        %v624 = vmul.f32 %v607, %v623
        %vm625 = vcmp.eq.f32.partialorder %v607, inf
        %v626 = vsel %vm625, %v607, %v624
        %vm627 = vcmp.eq.f32.partialorder %v607, 0.0
        %v628 = vand.u32 %v607, 2147483648
        %v629 = vsel %vm627, %v628, %v626
        %v630 = vrsqrt.pop %v608
        %v631 = vmul.f32 %v608, %v630
        %vm632 = vcmp.eq.f32.partialorder %v608, inf
        %v633 = vsel %vm632, %v608, %v631
        %vm634 = vcmp.eq.f32.partialorder %v608, 0.0
        %v635 = vand.u32 %v608, 2147483648
        %v636 = vsel %vm634, %v635, %v633
        %v637 = vmul.f32 %v575, %v575
        %v638 = vmul.f32 %v579, %v579
        %v639 = vmul.f32 %v585, %v585
        %v640 = vmul.f32 %v589, %v589
        %v641 = vmul.f32 %v577, %v577
        %v642 = vmul.f32 %v581, %v581
        %v643 = vmul.f32 %v587, %v587
        %v644 = vmul.f32 %v591, %v591
        %v645 = vadd.f32 %v637, %v641
        %v646 = vadd.f32 %v638, %v642
        %v647 = vadd.f32 %v639, %v643
        %v648 = vadd.f32 %v640, %v644
        %v649 = vmax.f32 %v645, 1e-07
        %v650 = vmax.f32 %v646, 1e-07
        %v651 = vmax.f32 %v647, 1e-07
        %v652 = vmax.f32 %v648, 1e-07
        %v653 = vrsqrt.pop %v649
        %v654 = vmul.f32 %v649, %v653
        %vm655 = vcmp.eq.f32.partialorder %v649, inf
        %v656 = vsel %vm655, %v649, %v654
        %vm657 = vcmp.eq.f32.partialorder %v649, 0.0
        %v658 = vand.u32 %v649, 2147483648
        %v659 = vsel %vm657, %v658, %v656
        %v660 = vrsqrt.pop %v650
        %v661 = vmul.f32 %v650, %v660
        %vm662 = vcmp.eq.f32.partialorder %v650, inf
        %v663 = vsel %vm662, %v650, %v661
        %vm664 = vcmp.eq.f32.partialorder %v650, 0.0
        %v665 = vand.u32 %v650, 2147483648
        %v666 = vsel %vm664, %v665, %v663
        %v667 = vrsqrt.pop %v651
        %v668 = vmul.f32 %v651, %v667
        %vm669 = vcmp.eq.f32.partialorder %v651, inf
        %v670 = vsel %vm669, %v651, %v668
        %vm671 = vcmp.eq.f32.partialorder %v651, 0.0
        %v672 = vand.u32 %v651, 2147483648
        %v673 = vsel %vm671, %v672, %v670
        %v674 = vrsqrt.pop %v652
        %v675 = vmul.f32 %v652, %v674
        %vm676 = vcmp.eq.f32.partialorder %v652, inf
        %v677 = vsel %vm676, %v652, %v675
        %vm678 = vcmp.eq.f32.partialorder %v652, 0.0
        %v679 = vand.u32 %v652, 2147483648
        %v680 = vsel %vm678, %v679, %v677
        %v681 = vsub.f32 %v659, %v615
        %v682 = vsub.f32 %v666, %v622
        %v683 = vsub.f32 %v673, %v629
        %v684 = vsub.f32 %v680, %v636
        %v685 = vld [vmem:[#allocation2] sm:$0xff]
        %v686 = vld [vmem:[#allocation2 + $0x8] sm:$0xff]
        %v687 = vld [vmem:[#allocation2 + $0x10] sm:$0xff]
        %v688 = vld [vmem:[#allocation2 + $0x18] sm:$0xff]
        %v689 = vmul.f32 %v681, %v681
        %v690 = vmul.f32 %v682, %v682
        %v691 = vmul.f32 %v683, %v683
        %v692 = vmul.f32 %v684, %v684
        %v693 = vadd.f32 %v685, %v689
        %v694 = vadd.f32 %v686, %v690
        %v695 = vadd.f32 %v687, %v691
        %v696 = vadd.f32 %v688, %v692
        %697 = vst [vmem:[#allocation2] sm:$0xff] %v693
        %698 = vst [vmem:[#allocation2 + $0x8] sm:$0xff] %v694
        %699 = vst [vmem:[#allocation2 + $0x10] sm:$0xff] %v695
        %700 = vst [vmem:[#allocation2 + $0x18] sm:$0xff] %v696
        %v701 = vld [vmem:[#allocation3] sm:$0xff]
        %v702 = vld [vmem:[#allocation3 + $0x8] sm:$0xff]
        %v703 = vld [vmem:[#allocation3 + $0x10] sm:$0xff]
        %v704 = vld [vmem:[#allocation3 + $0x18] sm:$0xff]
        %v705 = vmul.f32 %v659, %v659
        %v706 = vmul.f32 %v666, %v666
        %v707 = vmul.f32 %v673, %v673
        %v708 = vmul.f32 %v680, %v680
        %v709 = vadd.f32 %v701, %v705
        %v710 = vadd.f32 %v702, %v706
        %v711 = vadd.f32 %v703, %v707
        %v712 = vadd.f32 %v704, %v708
        %713 = vst [vmem:[#allocation3] sm:$0xff] %v709
        %714 = vst [vmem:[#allocation3 + $0x8] sm:$0xff] %v710
        %715 = vst [vmem:[#allocation3 + $0x10] sm:$0xff] %v711
        %716 = vst [vmem:[#allocation3 + $0x18] sm:$0xff] %v712
        %v717 = vld [vmem:[#allocation4] sm:$0xff]
        %v718 = vld [vmem:[#allocation4 + $0x8] sm:$0xff]
        %v719 = vld [vmem:[#allocation4 + $0x10] sm:$0xff]
        %v720 = vld [vmem:[#allocation4 + $0x18] sm:$0xff]
        %v721 = vlog2.pop %v615
        %v722 = vmul.f32 %v721, 0.6931472
        %v723 = vlog2.pop %v622
        %v724 = vmul.f32 %v723, 0.6931472
        %v725 = vlog2.pop %v629
        %v726 = vmul.f32 %v725, 0.6931472
        %v727 = vlog2.pop %v636
        %v728 = vmul.f32 %v727, 0.6931472
        %v729 = vlog2.pop %v659
        %v730 = vmul.f32 %v729, 0.6931472
        %v731 = vlog2.pop %v666
        %v732 = vmul.f32 %v731, 0.6931472
        %v733 = vlog2.pop %v673
        %v734 = vmul.f32 %v733, 0.6931472
        %v735 = vlog2.pop %v680
        %v736 = vmul.f32 %v735, 0.6931472
        %v737 = vsub.f32 %v722, %v730
        %v738 = vsub.f32 %v724, %v732
        %v739 = vsub.f32 %v726, %v734
        %v740 = vsub.f32 %v728, %v736
        %v741 = vand.u32 2147483647, %v737
        %v742 = vand.u32 2147483647, %v738
        %v743 = vand.u32 2147483647, %v739
        %v744 = vand.u32 2147483647, %v740
        %v745 = vadd.f32 %v717, %v741
        %v746 = vadd.f32 %v718, %v742
        %v747 = vadd.f32 %v719, %v743
        %v748 = vadd.f32 %v720, %v744
        %749 = vst [vmem:[#allocation4] sm:$0xff] %v745
        %750 = vst [vmem:[#allocation4 + $0x8] sm:$0xff] %v746
        %751 = vst [vmem:[#allocation4 + $0x10] sm:$0xff] %v747
        %752 = vst [vmem:[#allocation4 + $0x18] sm:$0xff] %v748
        %p753 = scmp.eq.s32.totalorder %s34, 1
        // Predicated region
        $region49: #{tpu_custom_call.1} parent=31 // pred_check
          %p754 = pneg %p753
        $region50: #{tpu_custom_call.1} parent=31 // pred_check_branch
          %756 = sbr.rel (%p754) target = $region52
        $region51: #{tpu_custom_call.1} parent=31 // pred_region
          %v757 = vld [vmem:[#allocation2] sm:$0xff]
          %v758 = vld [vmem:[#allocation2 + $0x8] sm:$0xff]
          %v759 = vld [vmem:[#allocation2 + $0x10] sm:$0xff]
          %v760 = vld [vmem:[#allocation2 + $0x18] sm:$0xff]
          %v761 = vadd.f32 %v757, %v758
          %v762 = vadd.f32 %v761, %v759
          %v763 = vadd.f32 %v762, %v760
          %764 = vadd.xlane.f32.xlu0 %v763
          %v765 = vpop.xlane.xlu0 %764
          %v766 = vrot.slane %v765, 4
          %v767 = vadd.f32 %v765, %v766
          %v768 = vrot.slane %v767, 2
          %v769 = vadd.f32 %v767, %v768
          %v770 = vrot.slane %v769, 1
          %v771 = vadd.f32 %v769, %v770
          %s772 = vtos %v771
          %v773 = vstv %s772
          %vm774 = vcmask 0
          %775 = vst.msk [vmem:[%s323] sm:$0x1] %vm774, %v773
          %v776 = vld [vmem:[#allocation3] sm:$0xff]
          %v777 = vld [vmem:[#allocation3 + $0x8] sm:$0xff]
          %v778 = vld [vmem:[#allocation3 + $0x10] sm:$0xff]
          %v779 = vld [vmem:[#allocation3 + $0x18] sm:$0xff]
          %v780 = vadd.f32 %v776, %v777
          %v781 = vadd.f32 %v780, %v778
          %v782 = vadd.f32 %v781, %v779
          %783 = vadd.xlane.f32.xlu0 %v782
          %v784 = vpop.xlane.xlu0 %783
          %v785 = vrot.slane %v784, 4
          %v786 = vadd.f32 %v784, %v785
          %v787 = vrot.slane %v786, 2
          %v788 = vadd.f32 %v786, %v787
          %v789 = vrot.slane %v788, 1
          %v790 = vadd.f32 %v788, %v789
          %s791 = vtos %v790
          %v792 = vstv %s791
          %793 = vst.msk [vmem:[%s329] sm:$0x1] %vm774, %v792
          %v794 = vld [vmem:[#allocation4] sm:$0xff]
          %v795 = vld [vmem:[#allocation4 + $0x8] sm:$0xff]
          %v796 = vld [vmem:[#allocation4 + $0x10] sm:$0xff]
          %v797 = vld [vmem:[#allocation4 + $0x18] sm:$0xff]
          %v798 = vadd.f32 %v794, %v795
          %v799 = vadd.f32 %v798, %v796
          %v800 = vadd.f32 %v799, %v797
          %801 = vadd.xlane.f32.xlu0 %v800
          %v802 = vpop.xlane.xlu0 %801
          %v803 = vrot.slane %v802, 4
          %v804 = vadd.f32 %v802, %v803
          %v805 = vrot.slane %v804, 2
          %v806 = vadd.f32 %v804, %v805
          %v807 = vrot.slane %v806, 1
          %v808 = vadd.f32 %v806, %v807
          %s809 = vtos %v808
          %v810 = vstv %s809
          %811 = vst.msk [vmem:[%s335] sm:$0x1] %vm774, %v810
        $region52: #{tpu_custom_call.1} parent=31 // pred_fallthru
          _
        %s812 = sand.u32 %s130, 1
        %s813 = scalar_lea.sflag [#allocation7], %s812
        %s814 = sand.u32 %s130, 1
        %s815 = scalar_lea.vmem [#allocation11], %s814
        %s816 = sand.u32 %s29, 1
        %s817 = scalar_lea.sflag [#allocation13], %s816
        %s818 = sand.u32 %s156, 1
        %s819 = scalar_lea.vmem [#allocation12], %s818
        %s820 = sand.u32 %s29, 1
        %s821 = scalar_lea.sflag [#allocation13], %s820
        %s822 = sand.u32 %s182, 1
        %s823 = scalar_lea.vmem [#allocation14], %s822
        // Predicated region
        $region53: #{tpu_custom_call.1} parent=31 // pred_check
          %p824 = pneg %p140
        $region54: #{tpu_custom_call.1} parent=31 // pred_check_branch
          %826 = sbr.rel (%p824) target = $region56
        $region55: #{tpu_custom_call.1} parent=31 // pred_region
          %s828 = ssub.s32 16, 16
          %829 = vsyncadd %s813, %s828
          %s830 = smul.addr %s33, 16
          %s831 = scalar_lea.hbm %s3, %s830
          %s833 = sshll.u32 %s815, 4
          %s834 = int_to_ptr.vmem [resolvable:$true] %s833
          %836 = dma.vmem_to_hbm [thread:$0]  %s834, 16, %s831, %s813
        $region56: #{tpu_custom_call.1} parent=31 // pred_fallthru
          _
        // Predicated region
        $region57: #{tpu_custom_call.1} parent=31 // pred_check
          %p837 = pneg %p166
        $region58: #{tpu_custom_call.1} parent=31 // pred_check_branch
          %839 = sbr.rel (%p837) target = $region60
        $region59: #{tpu_custom_call.1} parent=31 // pred_region
          %s841 = ssub.s32 16, 16
          %842 = vsyncadd %s817, %s841
          %s843 = smul.addr %s33, 16
          %s844 = scalar_lea.hbm %s4, %s843
          %s846 = sshll.u32 %s819, 4
          %s847 = int_to_ptr.vmem [resolvable:$true] %s846
          %849 = dma.vmem_to_hbm [thread:$0]  %s847, 16, %s844, %s817
        $region60: #{tpu_custom_call.1} parent=31 // pred_fallthru
          _
        // Predicated region
        $region61: #{tpu_custom_call.1} parent=31 // pred_check
          %p850 = pneg %p192
        $region62: #{tpu_custom_call.1} parent=31 // pred_check_branch
          %852 = sbr.rel (%p850) target = $region64
        $region63: #{tpu_custom_call.1} parent=31 // pred_region
          %s854 = ssub.s32 16, 16
          %855 = vsyncadd %s821, %s854
          %s856 = smul.addr %s33, 16
          %s857 = scalar_lea.hbm %s5, %s856
          %s859 = sshll.u32 %s823, 4
          %s860 = int_to_ptr.vmem [resolvable:$true] %s859
          %862 = dma.vmem_to_hbm [thread:$0]  %s860, 16, %s857, %s821
        $region64: #{tpu_custom_call.1} parent=31 // pred_fallthru
          _
      $region32: #{tpu_custom_call.1} parent=5 // pred_fallthru
        _
      %p863 = scmp.le.s32.totalorder 2, %s24
      // Predicated region
      $region65: #{tpu_custom_call.1} parent=5 // pred_check
        %p864 = pneg %p863
      $region66: #{tpu_custom_call.1} parent=5 // pred_check_branch
        %866 = sbr.rel (%p864) target = $region68
      $region67: #{tpu_custom_call.1} parent=5 // pred_region
        %s867 = ssub.s32 %s24, 2
        // Predicated region
        $region69: #{tpu_custom_call.1} parent=67 // pred_check
          %p868 = pneg %p146
        $region70: #{tpu_custom_call.1} parent=67 // pred_check_branch
          %870 = sbr.rel (%p868) target = $region72
        $region71: #{tpu_custom_call.1} parent=67 // pred_region
          %s871 = sand.u32 %s131, 1
          %s872 = scalar_lea.sflag [#allocation7], %s871
          %s873 = sand.u32 %s131, 1
          %s874 = scalar_lea.vmem [#allocation11], %s873
          %875 = dma.done %s872, 16
        $region72: #{tpu_custom_call.1} parent=67 // pred_fallthru
          _
        // Predicated region
        $region73: #{tpu_custom_call.1} parent=67 // pred_check
          %p876 = pneg %p172
        $region74: #{tpu_custom_call.1} parent=67 // pred_check_branch
          %878 = sbr.rel (%p876) target = $region76
        $region75: #{tpu_custom_call.1} parent=67 // pred_region
          %s879 = sand.u32 %s30, 1
          %s880 = scalar_lea.sflag [#allocation13], %s879
          %s881 = sand.u32 %s157, 1
          %s882 = scalar_lea.vmem [#allocation12], %s881
          %883 = dma.done %s880, 16
        $region76: #{tpu_custom_call.1} parent=67 // pred_fallthru
          _
        // Predicated region
        $region77: #{tpu_custom_call.1} parent=67 // pred_check
          %p884 = pneg %p198
        $region78: #{tpu_custom_call.1} parent=67 // pred_check_branch
          %886 = sbr.rel (%p884) target = $region80
        $region79: #{tpu_custom_call.1} parent=67 // pred_region
          %s887 = sand.u32 %s30, 1
          %s888 = scalar_lea.sflag [#allocation13], %s887
          %s889 = sand.u32 %s183, 1
          %s890 = scalar_lea.vmem [#allocation14], %s889
          %891 = dma.done %s888, 16
        $region80: #{tpu_custom_call.1} parent=67 // pred_fallthru
          _
      $region68: #{tpu_custom_call.1} parent=5 // pred_fallthru
        _
    $region6: #{tpu_custom_call.1} parent=1 // loop_footer
      %s28 = sadd.s32 1, %s24
    $region7: #{tpu_custom_call.1} parent=1 // loop_footer_branch
      %23 = sbr.rel target = $region3
    $region8: #{tpu_custom_call.1} parent=1 // loop_exit
      _
    %892 = vsyncpa [#allocation6], 1
    %s893 = scalar_lea.sflag [#allocation6], 1
    %894 = vsyncpa %s893, 1
    %895 = vsyncpa [#allocation9], 1
    %s896 = scalar_lea.sflag [#allocation9], 1
    %897 = vsyncpa %s896, 1
    %898 = vsyncpa [#allocation7], 1
    %s899 = scalar_lea.sflag [#allocation7], 1
    %900 = vsyncpa %s899, 1
    %901 = vsyncpa [#allocation13], 1
    %s902 = scalar_lea.sflag [#allocation13], 1
    %903 = vsyncpa %s902, 1

</llo_original>
